<compile_context>
chip_gen: v6e
topology: v6e:2x2x1
jax: 0.10.0
libtpu: 0.0.40
codegen_flags: <defaults>
</compile_context>

<pallas_src>
import functools

import jax
import jax.numpy as jnp
from jax.experimental import pallas as pl
from jax.experimental.pallas import tpu as pltpu


def _round_up(x, m):
    return ((x + m - 1) // m) * m


def _masked_l1_partial_kernel(pred_ref, gt_ref, out_ref, acc_ref, *, mask_val):
    step = pl.program_id(1)  # reduction axis (last, "arbitrary")

    @pl.when(step == 0)
    def _():
        acc_ref[...] = jnp.zeros_like(acc_ref)

    gt = gt_ref[...]
    pred = pred_ref[...]
    diff = jnp.abs(gt.astype(jnp.float32) - pred.astype(jnp.float32))
    if mask_val is not None:
        # Compare in the input dtype (same as torch's depth_gt == mask_val).
        diff = jnp.where(gt == jnp.asarray(mask_val, dtype=gt.dtype),
                         jnp.float32(0.0), diff)

    # Lane-preserving partial accumulation: fold the (tm, lanes) tile into the
    # (8, lanes) accumulator with major-axis (sublane-aligned) VPU adds only.
    rows, lanes = diff.shape
    acc_ref[...] += jnp.sum(diff.reshape(rows // 8, 8, lanes), axis=0)

    # Dump the vector partials once per shard; the cross-lane reduce happens
    # in the wrapper (writeback is just num_shards * 8 * lanes f32).
    @pl.when(step == pl.num_programs(1) - 1)
    def _():
        out_ref[...] = acc_ref[...].reshape((1,) + acc_ref.shape)


def masked_depth_loss(depth_out, depth_gt, mask_val=0, *,
                      lanes=512, row_tile=512, num_shards=2):
    """depth_out, depth_gt: float arrays (e.g. NCHW) of identical shape."""
    assert depth_out.shape == depth_gt.shape
    size = depth_out.size
    count = jnp.float32(size)  # PyTorch mean divides by ALL elements

    pred_flat = depth_out.reshape(-1)
    gt_flat = depth_gt.reshape(-1)

    # Lane-dense layout: (rows_padded, lanes) with lanes a multiple of 128.
    pad_val = mask_val if mask_val is not None else 0
    rows = -(-size // lanes)
    rows_per_shard = -(-rows // num_shards)
    # Multiple of 16 keeps sublane packing aligned even for bf16/fp16 inputs.
    tm = min(row_tile, _round_up(rows_per_shard, 16))
    n_steps = -(-rows_per_shard // tm)
    rows_padded = num_shards * n_steps * tm
    pad = rows_padded * lanes - size
    if pad:
        # Padded gt == mask_val (or pred == gt when mask_val is None)
        # => padded elements contribute exactly 0 to the masked-L1 sum.
        gt_flat = jnp.pad(gt_flat, (0, pad), constant_values=pad_val)
        pred_flat = jnp.pad(pred_flat, (0, pad), constant_values=pad_val)

    pred2d = pred_flat.reshape(rows_padded, lanes)
    gt2d = gt_flat.reshape(rows_padded, lanes)

    kernel = functools.partial(_masked_l1_partial_kernel, mask_val=mask_val)
    in_map = lambda s, i: (s * n_steps + i, 0)

    partials = pl.pallas_call(
        kernel,
        out_shape=jax.ShapeDtypeStruct((num_shards, 8, lanes), jnp.float32),
        grid_spec=pltpu.PrefetchScalarGridSpec(
            num_scalar_prefetch=0,
            grid=(num_shards, n_steps),
            in_specs=[
                pl.BlockSpec((tm, lanes), in_map),
                pl.BlockSpec((tm, lanes), in_map),
            ],
            out_specs=pl.BlockSpec((1, 8, lanes), lambda s, i: (s, 0, 0)),
            scratch_shapes=[pltpu.VMEM((8, lanes), jnp.float32)],
        ),
        compiler_params=pltpu.CompilerParams(
            # shard rows across cores (v7x megacore); reduce along last axis
            dimension_semantics=("parallel", "arbitrary"),
        ),
    )(pred2d, gt2d)

    return (jnp.sum(partials) / count).astype(jnp.float32)


def _reference_loss(depth_out, depth_gt, mask_val=0):
    loss = jnp.abs(depth_gt.astype(jnp.float32) - depth_out.astype(jnp.float32))
    if mask_val is not None:
        loss = jnp.where(depth_gt == mask_val, 0.0, loss)
    return loss.mean()


if __name__ == "__main__":
    key = jax.random.PRNGKey(0)
    k1, k2, k3 = jax.random.split(key, 3)

    # NCHW, like the PyTorch module's inputs.
    N, C, H, W = 2, 4, 16, 16
    depth_out = jax.random.uniform(k1, (N, C, H, W), dtype=jnp.float32)
    depth_gt = jax.random.uniform(k2, (N, C, H, W), dtype=jnp.float32)
    # Deterministically zero out ~25% of gt to exercise the mask path.
    hole_mask = jax.random.uniform(k3, (N, C, H, W)) < 0.25
    depth_gt = jnp.where(hole_mask, 0.0, depth_gt)

    loss = jax.block_until_ready(masked_depth_loss(depth_out, depth_gt, mask_val=0))
    ref = _reference_loss(depth_out, depth_gt, mask_val=0)
    assert jnp.allclose(loss, ref, rtol=1e-5, atol=1e-6), (loss, ref)

    # Also exercise the mask_val=None path and a ragged, non-128-aligned shape
    # (forces the lane-dense padding path).
    d2_out = jax.random.uniform(k1, (1, 1, 7, 19), dtype=jnp.float32)
    d2_gt = jax.random.uniform(k2, (1, 1, 7, 19), dtype=jnp.float32)
    loss2 = jax.block_until_ready(masked_depth_loss(d2_out, d2_gt, mask_val=None))
    ref2 = _reference_loss(d2_out, d2_gt, mask_val=None)
    assert jnp.allclose(loss2, ref2, rtol=1e-5, atol=1e-6), (loss2, ref2)

    # bf16 inputs (halved HBM traffic path; kernel upcasts to f32).
    d3_out = jax.random.uniform(k1, (2, 1, 64, 96), dtype=jnp.float32).astype(jnp.bfloat16)
    d3_gt = jax.random.uniform(k2, (2, 1, 64, 96), dtype=jnp.float32).astype(jnp.bfloat16)
    d3_gt = jnp.where(jax.random.uniform(k3, (2, 1, 64, 96)) < 0.25,
                      jnp.bfloat16(0), d3_gt)
    loss3 = jax.block_until_ready(masked_depth_loss(d3_out, d3_gt, mask_val=0))
    ref3 = _reference_loss(d3_out, d3_gt, mask_val=0)
    assert jnp.allclose(loss3, ref3, rtol=1e-3, atol=1e-4), (loss3, ref3)

    print("KERNEL_OK")
</pallas_src>

<mosaic_0001>
module attributes {stable_mosaic.version = 11 : i64} {
  func.func @_masked_l1_partial_kernel(%arg0: i32, %arg1: i32, %arg2: memref<16x512xf32, #tpu.memory_space<vmem>>, %arg3: memref<16x512xf32, #tpu.memory_space<vmem>>, %arg4: memref<1x8x512xf32, #tpu.memory_space<vmem>>, %arg5: memref<8x512xf32, #tpu.memory_space<vmem>>) attributes {dimension_semantics = [#tpu.dimension_semantics<parallel>, #tpu.dimension_semantics<arbitrary>], iteration_bounds = array<i64: 2, 1>, scalar_prefetch = 0 : i64, scratch_operands = 1 : i64, tpu.core_type = #tpu.core_type<tc>, window_params = [{transform_indices = @transform_0, window_bounds = array<i64: 16, 512>}, {transform_indices = @transform_1, window_bounds = array<i64: 16, 512>}, {transform_indices = @transform_2, window_bounds = array<i64: 1, 8, 512>}]} {
    %c0_i32 = arith.constant 0 : i32
    %0 = arith.cmpi eq, %arg1, %c0_i32 : i32
    %1 = arith.extui %0 : i1 to i32
    %c0_i32_0 = arith.constant 0 : i32
    %2 = arith.cmpi ne, %1, %c0_i32_0 : i32
    scf.if %2 {
      %cst_12 = arith.constant 0.000000e+00 : f32
      %19 = vector.broadcast %cst_12 : f32 to vector<8x512xf32>
      %c0_13 = arith.constant 0 : index
      %c0_14 = arith.constant 0 : index
      %20 = vector.load %arg5[%c0_13, %c0_14] : memref<8x512xf32, #tpu.memory_space<vmem>>, vector<8x512xf32>
      tpu.vector_store %arg5[%c0_13, %c0_14], %19 {strides = array<i32>} : memref<8x512xf32, #tpu.memory_space<vmem>>, vector<8x512xf32>,
    } else {
    }
    %c0 = arith.constant 0 : index
    %c0_1 = arith.constant 0 : index
    %3 = vector.load %arg3[%c0, %c0_1] : memref<16x512xf32, #tpu.memory_space<vmem>>, vector<16x512xf32>
    %c0_2 = arith.constant 0 : index
    %c0_3 = arith.constant 0 : index
    %4 = vector.load %arg2[%c0_2, %c0_3] : memref<16x512xf32, #tpu.memory_space<vmem>>, vector<16x512xf32>
    %5 = arith.subf %3, %4 : vector<16x512xf32>
    %6 = math.absf %5 : vector<16x512xf32>
    %cst = arith.constant 0.000000e+00 : f32
    %7 = vector.broadcast %cst : f32 to vector<16x512xf32>
    %8 = arith.cmpf oeq, %3, %7 : vector<16x512xf32>
    %cst_4 = arith.constant 0.000000e+00 : f32
    %9 = vector.broadcast %cst_4 : f32 to vector<16x512xf32>
    %10 = arith.select %8, %9, %6 : vector<16x512xi1>, vector<16x512xf32>
    %c0_5 = arith.constant 0 : index
    %c0_6 = arith.constant 0 : index
    %11 = vector.load %arg5[%c0_5, %c0_6] : memref<8x512xf32, #tpu.memory_space<vmem>>, vector<8x512xf32>
    %12 = vector.shape_cast %10 : vector<16x512xf32> to vector<2x8x512xf32>
    %cst_7 = arith.constant dense<0.000000e+00> : vector<8x512xf32>
    %13 = vector.multi_reduction <add>, %12, %cst_7 [0] : vector<2x8x512xf32> to vector<8x512xf32>
    %14 = arith.addf %11, %13 : vector<8x512xf32>
    %c0_8 = arith.constant 0 : index
    %c0_9 = arith.constant 0 : index
    %15 = vector.load %arg5[%c0_8, %c0_9] : memref<8x512xf32, #tpu.memory_space<vmem>>, vector<8x512xf32>
    tpu.vector_store %arg5[%c0_8, %c0_9], %14 {strides = array<i32>} : memref<8x512xf32, #tpu.memory_space<vmem>>, vector<8x512xf32>,
    %c0_i32_10 = arith.constant 0 : i32
    %16 = arith.cmpi eq, %arg1, %c0_i32_10 : i32
    %17 = arith.extui %16 : i1 to i32
    %c0_i32_11 = arith.constant 0 : i32
    %18 = arith.cmpi ne, %17, %c0_i32_11 : i32
    scf.if %18 {
      %c0_12 = arith.constant 0 : index
      %c0_13 = arith.constant 0 : index
      %19 = vector.load %arg5[%c0_12, %c0_13] : memref<8x512xf32, #tpu.memory_space<vmem>>, vector<8x512xf32>
      %20 = vector.shape_cast %19 : vector<8x512xf32> to vector<1x8x512xf32>
      %c0_14 = arith.constant 0 : index
      %c0_15 = arith.constant 0 : index
      %c0_16 = arith.constant 0 : index
      %21 = vector.load %arg4[%c0_14, %c0_15, %c0_16] : memref<1x8x512xf32, #tpu.memory_space<vmem>>, vector<1x8x512xf32>
      tpu.vector_store %arg4[%c0_14, %c0_15, %c0_16], %20 {strides = array<i32>} : memref<1x8x512xf32, #tpu.memory_space<vmem>>, vector<1x8x512xf32>,
    } else {
    }
    return
  }
  func.func @transform_0(%arg0: i32, %arg1: i32) -> (i32, i32) {
    %c1_i32 = arith.constant 1 : i32
    %0 = arith.muli %arg0, %c1_i32 : i32
    %1 = arith.addi %0, %arg1 : i32
    %c0_i32 = arith.constant 0 : i32
    %c0_i32_0 = arith.constant 0 : i32
    return %1, %c0_i32 : i32, i32
  }
  func.func @transform_1(%arg0: i32, %arg1: i32) -> (i32, i32) {
    %c1_i32 = arith.constant 1 : i32
    %0 = arith.muli %arg0, %c1_i32 : i32
    %1 = arith.addi %0, %arg1 : i32
    %c0_i32 = arith.constant 0 : i32
    %c0_i32_0 = arith.constant 0 : i32
    return %1, %c0_i32 : i32, i32
  }
  func.func @transform_2(%arg0: i32, %arg1: i32) -> (i32, i32, i32) {
    %c0_i32 = arith.constant 0 : i32
    %c0_i32_0 = arith.constant 0 : i32
    %c0_i32_1 = arith.constant 0 : i32
    return %arg0, %c0_i32, %c0_i32_0 : i32, i32, i32
  }
}

</mosaic_0001>

<llo_original>
// kernel: tpu_custom_call.1
$region0: #{tpu_custom_call.1}
  #allocation0 [shape = 'u32[]', space=smem, size = 0x4, offset = 0x4, fixed_abs, tag = 'smem constant byte address 0x4 - core index']
  #allocation1 [shape = 'u32[144,128]{1,0:T(1,128)}', space=vmem, size = 0x12000, scoped, tag = 'internal scratch']
  #allocation2 [shape = 'f32[8,512]{1,0:T(8,128)}', space=vmem, size = 0x4000, scoped, tag = 'scratch operand']
  %s0 = inlined_call_operand.hbm [shape: f32[32,512], index: 0, kind: input, shape index: {}]
  %s1 = inlined_call_operand.hbm [shape: f32[32,512], index: 1, kind: input, shape index: {}]
  %s2 = inlined_call_operand.hbm [shape: f32[2,8,512], index: 2, kind: output, shape index: {}]
  %s3 = sld [smem:[#allocation0]]
  $region57: #{tpu_custom_call.1} parent=0
    _
  %s5 = ssub.s32 1, %s3
  %s6 = scalar_select 0, %s5, %s3
  $region1: #{tpu_custom_call.1} parent=0
    #allocation3 [shape = 'u8[65536]{0}', space=vmem, size = 0x10000, scoped, tag = 'input window, operand 0']
    #allocation4 [shape = 's32[2]{0}', space=sflag, size = 0x8, scoped, tag = 'scoped memory for tpu_custom_call.1']
    #allocation5 [shape = 's32[2]{0}', space=sflag, size = 0x8, scoped, tag = 'scoped memory for tpu_custom_call.1']
    #allocation6 [shape = 'u8[65536]{0}', space=vmem, size = 0x10000, scoped, tag = 'input window, operand 1']
    #allocation7 [shape = 's32[2]{0}', space=sflag, size = 0x8, scoped, tag = 'scoped memory for tpu_custom_call.1']
    #allocation8 [shape = 'u8[32768]{0}', space=vmem, size = 0x8000, scoped, tag = 'output window, operand 0']
    %7 = vsyncpa [#allocation4], 0
    %s8 = scalar_lea.sflag [#allocation4], 1
    %9 = vsyncpa %s8, 0
    %10 = vsyncpa [#allocation7], 0
    %s11 = scalar_lea.sflag [#allocation7], 1
    %12 = vsyncpa %s11, 0
    %13 = vsyncpa [#allocation5], 0
    %s14 = scalar_lea.sflag [#allocation5], 1
    %15 = vsyncpa %s14, 0
    loop: start=0, step=1, limit=4
    $region2: #{tpu_custom_call.1} parent=1 // loop_pre_header
      _
    $region3: #{tpu_custom_call.1} parent=1 // loop_header
      %s17 = sphi 0, %s21
      %p18 = scmp.ge.s32.totalorder %s17, 4
      %s24 = sphi 0, %s36
      %s25 = sphi 0, %s32
      %s26 = sphi 0, %s24
      %s27 = sphi 0, %s25
      %s28 = sphi 0, %s26
      %s29 = sphi 0, %s27
      %s41 = sphi 0, %s43
      %s44 = sphi 0, %s41
      %s45 = sphi 0, %s44
      %s61 = sphi 0, %s45
      %s69 = sphi 0, %s71
      %s72 = sphi 0, %s69
      %s73 = sphi 0, %s72
      %s89 = sphi 0, %s73
      %s95 = sphi 0, %s97
      %s98 = sphi 0, %s95
      %s99 = sphi 0, %s98
      %s115 = sphi 0, %s99
    $region4: #{tpu_custom_call.1} parent=1 // loop_header_branch
      %20 = sbr.rel (%p18) target = $region8
    $region5: #{tpu_custom_call.1} parent=1 // loop_body
      %s22 = ssub.s32 %s17, 1
      %s23 = ssub.s32 %s17, 2
      %s30 = sadd.s32 1, %s25
      %p31 = scmp.ge.s32.totalorder %s30, 1
      %s32 = scalar_select %p31, 0, %s30
      %s33 = sadd.s32 1, %s24
      %s34 = scalar_select %p31, %s33, %s24
      %p35 = scmp.ge.s32.totalorder %s34, 2
      %s36 = scalar_select %p35, 0, %s34
      %s37 = sadd.s32 %s24, %s25
      %s38 = sadd.s32 %s36, %s32
      %s39 = ssub.s32 %s37, %s38
      %p40 = scmp.eq.s32.totalorder %s39, 0
      %s42 = sadd.s32 %s41, 1
      %s43 = scalar_select %p40, %s41, %s42
      %p46 = pneg %p40
      %p47 = scmp.eq.s32.totalorder %s17, 1
      %p48 = por %p46, %p47
      %p49 = scmp.ne.s32.totalorder %s41, %s44
      %p50 = scmp.eq.s32.totalorder %s17, 0
      %p51 = por %p49, %p50
      %p52 = scmp.ne.s32.totalorder %s41, %s44
      %p53 = scmp.eq.s32.totalorder %s22, 1
      %p54 = por %p52, %p53
      %p55 = scmp.ne.s32.totalorder %s44, %s45
      %p56 = scmp.eq.s32.totalorder %s22, 0
      %p57 = por %p55, %p56
      %p58 = scmp.ne.s32.totalorder %s44, %s45
      %p59 = scmp.eq.s32.totalorder %s23, 1
      %p60 = por %p58, %p59
      %p62 = scmp.ne.s32.totalorder %s45, %s61
      %p63 = scmp.eq.s32.totalorder %s23, 0
      %p64 = por %p62, %p63
      %s65 = sadd.s32 %s24, %s25
      %s66 = sadd.s32 %s36, %s32
      %s67 = ssub.s32 %s65, %s66
      %p68 = scmp.eq.s32.totalorder %s67, 0
      %s70 = sadd.s32 %s69, 1
      %s71 = scalar_select %p68, %s69, %s70
      %p74 = pneg %p68
      %p75 = scmp.eq.s32.totalorder %s17, 1
      %p76 = por %p74, %p75
      %p77 = scmp.ne.s32.totalorder %s69, %s72
      %p78 = scmp.eq.s32.totalorder %s17, 0
      %p79 = por %p77, %p78
      %p80 = scmp.ne.s32.totalorder %s69, %s72
      %p81 = scmp.eq.s32.totalorder %s22, 1
      %p82 = por %p80, %p81
      %p83 = scmp.ne.s32.totalorder %s72, %s73
      %p84 = scmp.eq.s32.totalorder %s22, 0
      %p85 = por %p83, %p84
      %p86 = scmp.ne.s32.totalorder %s72, %s73
      %p87 = scmp.eq.s32.totalorder %s23, 1
      %p88 = por %p86, %p87
      %p90 = scmp.ne.s32.totalorder %s73, %s89
      %p91 = scmp.eq.s32.totalorder %s23, 0
      %p92 = por %p90, %p91
      %s93 = ssub.s32 %s24, %s36
      %p94 = scmp.eq.s32.totalorder %s93, 0
      %s96 = sadd.s32 %s95, 1
      %s97 = scalar_select %p94, %s95, %s96
      %p100 = pneg %p94
      %p101 = scmp.eq.s32.totalorder %s17, 1
      %p102 = por %p100, %p101
      %p103 = scmp.ne.s32.totalorder %s95, %s98
      %p104 = scmp.eq.s32.totalorder %s17, 0
      %p105 = por %p103, %p104
      %p106 = scmp.ne.s32.totalorder %s95, %s98
      %p107 = scmp.eq.s32.totalorder %s22, 1
      %p108 = por %p106, %p107
      %p109 = scmp.ne.s32.totalorder %s98, %s99
      %p110 = scmp.eq.s32.totalorder %s22, 0
      %p111 = por %p109, %p110
      %p112 = scmp.ne.s32.totalorder %s98, %s99
      %p113 = scmp.eq.s32.totalorder %s23, 1
      %p114 = por %p112, %p113
      %p116 = scmp.ne.s32.totalorder %s99, %s115
      %p117 = scmp.eq.s32.totalorder %s23, 0
      %p118 = por %p116, %p117
      %p119 = scmp.le.s32.totalorder 1, %s17
      %p120 = scmp.lt.s32.totalorder %s17, 3
      %p121 = pnand %p119, %p120
      %p122 = pneg %p121
      // Predicated region
      $region9: #{tpu_custom_call.1} parent=5 // pred_check
        _
      $region10: #{tpu_custom_call.1} parent=5 // pred_check_branch
        %124 = sbr.rel (%p121) target = $region12
      $region11: #{tpu_custom_call.1} parent=5 // pred_region
        %s125 = ssub.s32 %s17, 1
      $region12: #{tpu_custom_call.1} parent=5 // pred_fallthru
        _
      %p126 = scmp.lt.s32.totalorder %s17, 2
      // Predicated region
      $region13: #{tpu_custom_call.1} parent=5 // pred_check
        %p127 = pneg %p126
      $region14: #{tpu_custom_call.1} parent=5 // pred_check_branch
        %129 = sbr.rel (%p127) target = $region16
      $region15: #{tpu_custom_call.1} parent=5 // pred_region
        // Predicated region
        $region17: #{tpu_custom_call.1} parent=15 // pred_check
          %p130 = pneg %p51
        $region18: #{tpu_custom_call.1} parent=15 // pred_check_branch
          %132 = sbr.rel (%p130) target = $region20
        $region19: #{tpu_custom_call.1} parent=15 // pred_region
          %s133 = sand.u32 %s41, 1
          %s134 = scalar_lea.sflag [#allocation4], %s133
          %s135 = sand.u32 %s41, 1
          %s136 = smul.addr %s135, 64
          %s137 = scalar_lea.vmem [#allocation3], %s136
          %s138 = sadd.s32 %s24, %s25
          %s139 = smul.u32 2, %s138
          %s141 = ssub.s32 1024, 1024
          %142 = vsyncadd %s134, %s141
          %s143 = smul.addr %s139, 4
          %s144 = smul.addr %s143, 128
          %s145 = scalar_lea.hbm %s0, %s144
          %s146 = sshll.u32 %s137, 4
          %s147 = int_to_ptr.vmem [resolvable:$true] %s146
          %152 = dma.hbm_to_vmem [thread:$0]  %s145, 1024, %s147, %s134, 512, 512, 32
        $region20: #{tpu_custom_call.1} parent=15 // pred_fallthru
          _
        // Predicated region
        $region21: #{tpu_custom_call.1} parent=15 // pred_check
          %p153 = pneg %p79
        $region22: #{tpu_custom_call.1} parent=15 // pred_check_branch
          %155 = sbr.rel (%p153) target = $region24
        $region23: #{tpu_custom_call.1} parent=15 // pred_region
          %s156 = sand.u32 %s69, 1
          %s157 = scalar_lea.sflag [#allocation7], %s156
          %s158 = sand.u32 %s69, 1
          %s159 = smul.addr %s158, 64
          %s160 = scalar_lea.vmem [#allocation6], %s159
          %s161 = sadd.s32 %s24, %s25
          %s162 = smul.u32 2, %s161
          %s164 = ssub.s32 1024, 1024
          %165 = vsyncadd %s157, %s164
          %s166 = smul.addr %s162, 4
          %s167 = smul.addr %s166, 128
          %s168 = scalar_lea.hbm %s1, %s167
          %s169 = sshll.u32 %s160, 4
          %s170 = int_to_ptr.vmem [resolvable:$true] %s169
          %175 = dma.hbm_to_vmem [thread:$0]  %s168, 1024, %s170, %s157, 512, 512, 32
        $region24: #{tpu_custom_call.1} parent=15 // pred_fallthru
          _
      $region16: #{tpu_custom_call.1} parent=5 // pred_fallthru
        _
      %p176 = scmp.le.s32.totalorder 1, %s17
      %p177 = scmp.lt.s32.totalorder %s17, 3
      %p178 = pnand %p176, %p177
      %p179 = pneg %p178
      // Predicated region
      $region25: #{tpu_custom_call.1} parent=5 // pred_check
        _
      $region26: #{tpu_custom_call.1} parent=5 // pred_check_branch
        %181 = sbr.rel (%p178) target = $region28
      $region27: #{tpu_custom_call.1} parent=5 // pred_region
        %s182 = ssub.s32 %s17, 1
        %s183 = sand.u32 %s44, 1
        %s184 = scalar_lea.sflag [#allocation4], %s183
        %s185 = sand.u32 %s44, 1
        %s186 = smul.addr %s185, 64
        %s187 = scalar_lea.vmem [#allocation3], %s186
        // Predicated region
        $region29: #{tpu_custom_call.1} parent=27 // pred_check
          %p188 = pneg %p57
        $region30: #{tpu_custom_call.1} parent=27 // pred_check_branch
          %190 = sbr.rel (%p188) target = $region32
        $region31: #{tpu_custom_call.1} parent=27 // pred_region
          %191 = dma.done %s184, 1024
        $region32: #{tpu_custom_call.1} parent=27 // pred_fallthru
          _
        %s192 = sand.u32 %s72, 1
        %s193 = scalar_lea.sflag [#allocation7], %s192
        %s194 = sand.u32 %s72, 1
        %s195 = smul.addr %s194, 64
        %s196 = scalar_lea.vmem [#allocation6], %s195
        // Predicated region
        $region33: #{tpu_custom_call.1} parent=27 // pred_check
          %p197 = pneg %p85
        $region34: #{tpu_custom_call.1} parent=27 // pred_check_branch
          %199 = sbr.rel (%p197) target = $region36
        $region35: #{tpu_custom_call.1} parent=27 // pred_region
          %200 = dma.done %s193, 1024
        $region36: #{tpu_custom_call.1} parent=27 // pred_fallthru
          _
        %s201 = sand.u32 %s44, 1
        %s202 = scalar_lea.sflag [#allocation4], %s201
        %s203 = sand.u32 %s44, 1
        %s204 = smul.addr %s203, 64
        %s205 = scalar_lea.vmem [#allocation3], %s204
        %p206 = pneg %p57
        %p207 = pneg %p54
        %s208 = sand.u32 %s72, 1
        %s209 = scalar_lea.sflag [#allocation7], %s208
        %s210 = sand.u32 %s72, 1
        %s211 = smul.addr %s210, 64
        %s212 = scalar_lea.vmem [#allocation6], %s211
        %p213 = pneg %p85
        %p214 = pneg %p82
        %p215 = pneg %p111
        %p216 = pneg %p108
        %s217 = sand.u32 %s98, 1
        %s218 = scalar_lea.sflag [#allocation5], %s217
        %s219 = sand.u32 %s98, 1
        %s220 = smul.addr %s219, 32
        %s221 = scalar_lea.vmem [#allocation8], %s220
        %s222 = sadd.s32 %s26, %s27
        %s223 = smul.u32 2, %s222
        %s224 = sadd.s32 %s26, %s27
        %s225 = smul.u32 2, %s224
        %p226 = scmp.eq.s32.totalorder %s27, 0
        // Predicated region
        $region37: #{tpu_custom_call.1} parent=27 // pred_check
          %p227 = pneg %p226
        $region38: #{tpu_custom_call.1} parent=27 // pred_check_branch
          %229 = sbr.rel (%p227) target = $region40
        $region39: #{tpu_custom_call.1} parent=27 // pred_region
          %230 = vst [vmem:[#allocation2] sm:$0xff] 0.0
          %231 = vst [vmem:[#allocation2 + $0x8] sm:$0xff] 0.0
          %232 = vst [vmem:[#allocation2 + $0x10] sm:$0xff] 0.0
          %233 = vst [vmem:[#allocation2 + $0x18] sm:$0xff] 0.0
        $region40: #{tpu_custom_call.1} parent=27 // pred_fallthru
          _
        %v234 = vld [vmem:[%s196] sm:$0xff]
        %v235 = vld [vmem:[%s196 + $0x8] sm:$0xff]
        %v236 = vld [vmem:[%s196 + $0x10] sm:$0xff]
        %v237 = vld [vmem:[%s196 + $0x18] sm:$0xff]
        %v238 = vld [vmem:[%s196 + $0x20] sm:$0xff]
        %v239 = vld [vmem:[%s196 + $0x28] sm:$0xff]
        %v240 = vld [vmem:[%s196 + $0x30] sm:$0xff]
        %v241 = vld [vmem:[%s196 + $0x38] sm:$0xff]
        %v242 = vld [vmem:[%s187] sm:$0xff]
        %v243 = vld [vmem:[%s187 + $0x8] sm:$0xff]
        %v244 = vld [vmem:[%s187 + $0x10] sm:$0xff]
        %v245 = vld [vmem:[%s187 + $0x18] sm:$0xff]
        %v246 = vld [vmem:[%s187 + $0x20] sm:$0xff]
        %v247 = vld [vmem:[%s187 + $0x28] sm:$0xff]
        %v248 = vld [vmem:[%s187 + $0x30] sm:$0xff]
        %v249 = vld [vmem:[%s187 + $0x38] sm:$0xff]
        %v250 = vsub.f32 %v234, %v242
        %v251 = vsub.f32 %v235, %v243
        %v252 = vsub.f32 %v236, %v244
        %v253 = vsub.f32 %v237, %v245
        %v254 = vsub.f32 %v238, %v246
        %v255 = vsub.f32 %v239, %v247
        %v256 = vsub.f32 %v240, %v248
        %v257 = vsub.f32 %v241, %v249
        %v258 = vand.u32 2147483647, %v250
        %v259 = vand.u32 2147483647, %v251
        %v260 = vand.u32 2147483647, %v252
        %v261 = vand.u32 2147483647, %v253
        %v262 = vand.u32 2147483647, %v254
        %v263 = vand.u32 2147483647, %v255
        %v264 = vand.u32 2147483647, %v256
        %v265 = vand.u32 2147483647, %v257
        %vm266 = vcmp.eq.f32.partialorder %v234, 0.0
        %vm267 = vcmp.eq.f32.partialorder %v235, 0.0
        %vm268 = vcmp.eq.f32.partialorder %v236, 0.0
        %vm269 = vcmp.eq.f32.partialorder %v237, 0.0
        %vm270 = vcmp.eq.f32.partialorder %v238, 0.0
        %vm271 = vcmp.eq.f32.partialorder %v239, 0.0
        %vm272 = vcmp.eq.f32.partialorder %v240, 0.0
        %vm273 = vcmp.eq.f32.partialorder %v241, 0.0
        %v274 = vsel %vm266, 0.0, %v258
        %v275 = vsel %vm267, 0.0, %v259
        %v276 = vsel %vm268, 0.0, %v260
        %v277 = vsel %vm269, 0.0, %v261
        %v278 = vsel %vm270, 0.0, %v262
        %v279 = vsel %vm271, 0.0, %v263
        %v280 = vsel %vm272, 0.0, %v264
        %v281 = vsel %vm273, 0.0, %v265
        %v282 = vld [vmem:[#allocation2] sm:$0xff]
        %v283 = vld [vmem:[#allocation2 + $0x8] sm:$0xff]
        %v284 = vld [vmem:[#allocation2 + $0x10] sm:$0xff]
        %v285 = vld [vmem:[#allocation2 + $0x18] sm:$0xff]
        %v286 = vadd.f32 %v274, %v278
        %v287 = vadd.f32 %v275, %v279
        %v288 = vadd.f32 %v276, %v280
        %v289 = vadd.f32 %v277, %v281
        %v290 = vadd.f32 %v282, %v286
        %v291 = vadd.f32 %v283, %v287
        %v292 = vadd.f32 %v284, %v288
        %v293 = vadd.f32 %v285, %v289
        %294 = vst [vmem:[#allocation2] sm:$0xff] %v290
        %295 = vst [vmem:[#allocation2 + $0x8] sm:$0xff] %v291
        %296 = vst [vmem:[#allocation2 + $0x10] sm:$0xff] %v292
        %297 = vst [vmem:[#allocation2 + $0x18] sm:$0xff] %v293
        // Predicated region
        $region41: #{tpu_custom_call.1} parent=27 // pred_check
          %p298 = pneg %p226
        $region42: #{tpu_custom_call.1} parent=27 // pred_check_branch
          %300 = sbr.rel (%p298) target = $region44
        $region43: #{tpu_custom_call.1} parent=27 // pred_region
          %v301 = vld [vmem:[#allocation2] sm:$0xff]
          %v302 = vld [vmem:[#allocation2 + $0x8] sm:$0xff]
          %v303 = vld [vmem:[#allocation2 + $0x10] sm:$0xff]
          %v304 = vld [vmem:[#allocation2 + $0x18] sm:$0xff]
          %305 = vst [vmem:[%s221] sm:$0xff] %v301
          %306 = vst [vmem:[%s221 + $0x8] sm:$0xff] %v302
          %307 = vst [vmem:[%s221 + $0x10] sm:$0xff] %v303
          %308 = vst [vmem:[%s221 + $0x18] sm:$0xff] %v304
        $region44: #{tpu_custom_call.1} parent=27 // pred_fallthru
          _
        %s309 = sand.u32 %s98, 1
        %s310 = scalar_lea.sflag [#allocation5], %s309
        %s311 = sand.u32 %s98, 1
        %s312 = smul.addr %s311, 32
        %s313 = scalar_lea.vmem [#allocation8], %s312
        // Predicated region
        $region45: #{tpu_custom_call.1} parent=27 // pred_check
          %p314 = pneg %p108
        $region46: #{tpu_custom_call.1} parent=27 // pred_check_branch
          %316 = sbr.rel (%p314) target = $region48
        $region47: #{tpu_custom_call.1} parent=27 // pred_region
          %s318 = ssub.s32 512, 512
          %319 = vsyncadd %s310, %s318
          %s320 = smul.addr %s26, 4
          %s321 = smul.addr %s320, 128
          %s322 = scalar_lea.hbm %s2, %s321
          %s324 = sshll.u32 %s313, 4
          %s325 = int_to_ptr.vmem [resolvable:$true] %s324
          %327 = dma.vmem_to_hbm [thread:$0]  %s325, 512, %s322, %s310
        $region48: #{tpu_custom_call.1} parent=27 // pred_fallthru
          _
      $region28: #{tpu_custom_call.1} parent=5 // pred_fallthru
        _
      %p328 = scmp.le.s32.totalorder 2, %s17
      // Predicated region
      $region49: #{tpu_custom_call.1} parent=5 // pred_check
        %p329 = pneg %p328
      $region50: #{tpu_custom_call.1} parent=5 // pred_check_branch
        %331 = sbr.rel (%p329) target = $region52
      $region51: #{tpu_custom_call.1} parent=5 // pred_region
        %s332 = ssub.s32 %s17, 2
        // Predicated region
        $region53: #{tpu_custom_call.1} parent=51 // pred_check
          %p333 = pneg %p114
        $region54: #{tpu_custom_call.1} parent=51 // pred_check_branch
          %335 = sbr.rel (%p333) target = $region56
        $region55: #{tpu_custom_call.1} parent=51 // pred_region
          %s336 = sand.u32 %s99, 1
          %s337 = scalar_lea.sflag [#allocation5], %s336
          %s338 = sand.u32 %s99, 1
          %s339 = smul.addr %s338, 32
          %s340 = scalar_lea.vmem [#allocation8], %s339
          %341 = dma.done %s337, 512
        $region56: #{tpu_custom_call.1} parent=51 // pred_fallthru
          _
      $region52: #{tpu_custom_call.1} parent=5 // pred_fallthru
        _
    $region6: #{tpu_custom_call.1} parent=1 // loop_footer
      %s21 = sadd.s32 1, %s17
    $region7: #{tpu_custom_call.1} parent=1 // loop_footer_branch
      %16 = sbr.rel target = $region3
    $region8: #{tpu_custom_call.1} parent=1 // loop_exit
      _
    %342 = vsyncpa [#allocation4], 1
    %s343 = scalar_lea.sflag [#allocation4], 1
    %344 = vsyncpa %s343, 1
    %345 = vsyncpa [#allocation7], 1
    %s346 = scalar_lea.sflag [#allocation7], 1
    %347 = vsyncpa %s346, 1
    %348 = vsyncpa [#allocation5], 1
    %s349 = scalar_lea.sflag [#allocation5], 1
    %350 = vsyncpa %s349, 1

</llo_original>
